<compile_context>
chip_gen: v6e
topology: v6e:2x2x1
jax: 0.10.0
libtpu: 0.0.40
codegen_flags: <defaults>
</compile_context>

<pallas_src>
import functools

import jax
import jax.numpy as jnp
from jax.experimental import pallas as pl
from jax.experimental.pallas import tpu as pltpu

_LANE = 128      # lane width
_SUBLANE = 8     # f32 sublane count


def _round_up(a: int, m: int) -> int:
    return ((a + m - 1) // m) * m


def mlp_kernel(x_ref, w1_ref, b1_ref, w2_ref, b2_ref, o_ref):
    # Layer 1: MXU matmul with f32 accumulation; bias-add + ReLU stay in f32 (VPU).
    x = x_ref[...].astype(w1_ref.dtype)
    h = jnp.dot(x, w1_ref[...], preferred_element_type=jnp.float32)
    h = jnp.maximum(h + b1_ref[...], 0.0)                       # (TB, Hp) + (1, Hp)
    # Layer 2: cast h to the matmul dtype only right before the dot; f32 accumulate.
    y = jnp.dot(h.astype(w2_ref.dtype), w2_ref[...],
                preferred_element_type=jnp.float32)
    o_ref[...] = (y + b2_ref[...]).astype(o_ref.dtype)           # lane-dense vst


def _choose_tb(bp: int, k: int, op: int, in_bytes: int, tb_max: int) -> int:
    """Batch tile: VMEM-budgeted, multiple of 8, >=2 grid steps when batch allows."""
    # Double-buffered x (TB, K) + out (TB, Op) tiles must fit a conservative budget
    # (8 MiB -- comfortably under v5e's 16 MiB default scoped VMEM; weights are tiny).
    vmem_budget = 8 * 1024 * 1024
    row_bytes = 2 * (in_bytes * k + 4 * op)           # double-buffered in/out per row
    tb = min(tb_max, bp, max(_SUBLANE, (vmem_budget // row_bytes) // _SUBLANE * _SUBLANE))
    if bp >= 2 * _SUBLANE:
        # v7x has 2 TensorCores: make sure the "parallel" batch axis has >=2 steps.
        tb = min(tb, _round_up(pl.cdiv(bp, 2), _SUBLANE))
    return max(tb, _SUBLANE)


def make_simple_model_forward(w1, b1, w2, b2, *, tb_max: int = 1024,
                              use_bf16_matmul: bool = False):
    """w1: (input_dim, hidden), b1: (hidden,), w2: (hidden, output_dim), b2: (output_dim,).

    Returns a jitted forward(x) computing relu(x @ w1 + b1) @ w2 + b2, where x is
    (B, input_dim) and the result is (B, output_dim).
    """
    K, H = w1.shape
    O = w2.shape[1]
    Hp = _round_up(H, _LANE)
    Op = _round_up(O, _LANE)

    mm_dtype = jnp.bfloat16 if use_bf16_matmul else jnp.float32
    in_bytes = jnp.dtype(mm_dtype).itemsize

    # ---- one-time (init-time) weight/bias padding; hoisted out of the hot path ----
    w1p = jnp.pad(w1, ((0, 0), (0, Hp - H))).astype(mm_dtype)        # (K,  Hp)
    b1p = jnp.pad(b1, (0, Hp - H)).astype(jnp.float32).reshape(1, Hp)
    w2p = jnp.pad(w2, ((0, Hp - H), (0, Op - O))).astype(mm_dtype)   # (Hp, Op)
    b2p = jnp.pad(b2, (0, Op - O)).astype(jnp.float32).reshape(1, Op)

    @jax.jit
    def forward(x):
        B = x.shape[0]
        out_dtype = x.dtype

        Bp = _round_up(B, _SUBLANE)                 # only pad batch to sublane multiple
        TB = _choose_tb(Bp, K, Op, in_bytes, tb_max)
        grid = (pl.cdiv(Bp, TB),)                   # ragged last block OK (rows indep.)

        xp = jnp.pad(x, ((0, Bp - B), (0, 0))).astype(mm_dtype)      # no feature pad

        # Advisory cost estimate from the REAL (unpadded) dims.
        flops = 2 * B * (K * H + H * O)
        bytes_accessed = (in_bytes * (B * K + K * H + H * O)
                          + 4 * (H + O + B * O))
        cost = pl.CostEstimate(flops=flops, transcendentals=0,
                               bytes_accessed=bytes_accessed)

        out_padded = pl.pallas_call(
            mlp_kernel,
            out_shape=jax.ShapeDtypeStruct((Bp, Op), out_dtype),
            grid=grid,
            in_specs=[
                pl.BlockSpec((TB, K), lambda i: (i, 0)),    # x tile, advances with grid
                pl.BlockSpec((K, Hp), lambda i: (0, 0)),    # W1 resident
                pl.BlockSpec((1, Hp), lambda i: (0, 0)),    # b1 resident (f32)
                pl.BlockSpec((Hp, Op), lambda i: (0, 0)),   # W2 resident
                pl.BlockSpec((1, Op), lambda i: (0, 0)),    # b2 resident (f32)
            ],
            out_specs=pl.BlockSpec((TB, Op), lambda i: (i, 0)),
            compiler_params=pltpu.CompilerParams(
                dimension_semantics=("parallel",)),
            cost_estimate=cost,
        )(xp, w1p, b1p, w2p, b2p)

        # Slice the padded rows/columns back off (fused by jit).
        return out_padded[:B, :O]

    return forward


def simple_model_forward(x, w1, b1, w2, b2, **kwargs):
    """Convenience one-shot entry point (prefer make_simple_model_forward for reuse)."""
    return make_simple_model_forward(w1, b1, w2, b2, **kwargs)(x)


if __name__ == "__main__":
    # Small shapes consistent with the module: input_dim=16, hidden_dim=32, output_dim=8.
    batch, input_dim, hidden_dim, output_dim = 8, 16, 32, 8

    key = jax.random.PRNGKey(0)
    kx, kw1, kb1, kw2, kb2 = jax.random.split(key, 5)

    x = jax.random.normal(kx, (batch, input_dim), dtype=jnp.float32)
    # Deterministic parameter init (synthetic; not loaded from a checkpoint).
    w1 = jax.random.normal(kw1, (input_dim, hidden_dim), dtype=jnp.float32) * 0.1
    b1 = jax.random.normal(kb1, (hidden_dim,), dtype=jnp.float32) * 0.1
    w2 = jax.random.normal(kw2, (hidden_dim, output_dim), dtype=jnp.float32) * 0.1
    b2 = jax.random.normal(kb2, (output_dim,), dtype=jnp.float32) * 0.1

    # Reference (same math as nn.Sequential(Linear, ReLU, Linear)).
    ref = jnp.maximum(x @ w1 + b1, 0.0) @ w2 + b2

    # Exact-fp32 path.
    fwd = make_simple_model_forward(w1, b1, w2, b2)
    out = fwd(x)
    jax.block_until_ready(out)
    assert out.shape == (batch, output_dim)
    assert jnp.allclose(out, ref, atol=1e-5, rtol=1e-5)

    # bf16-MXU path (native on v6e/v7x; f32 accumulation) -- looser tolerance.
    fwd_bf16 = make_simple_model_forward(w1, b1, w2, b2, use_bf16_matmul=True)
    out_bf16 = fwd_bf16(x)
    jax.block_until_ready(out_bf16)
    assert jnp.allclose(out_bf16, ref, atol=5e-2, rtol=5e-2)

    print("KERNEL_OK")
</pallas_src>

<mosaic_0001>
module attributes {stable_mosaic.version = 11 : i64} {
  func.func @mlp_kernel(%arg0: i32, %arg1: memref<8x16xf32, #tpu.memory_space<vmem>>, %arg2: memref<16x128xf32, #tpu.memory_space<vmem>>, %arg3: memref<1x128xf32, #tpu.memory_space<vmem>>, %arg4: memref<128x128xf32, #tpu.memory_space<vmem>>, %arg5: memref<1x128xf32, #tpu.memory_space<vmem>>, %arg6: memref<8x128xf32, #tpu.memory_space<vmem>>) attributes {dimension_semantics = [#tpu.dimension_semantics<parallel>], iteration_bounds = array<i64: 1>, scalar_prefetch = 0 : i64, scratch_operands = 0 : i64, tpu.core_type = #tpu.core_type<tc>, window_params = [{transform_indices = @transform_0, window_bounds = array<i64: 8, 16>}, {pipeline_mode = #tpu.pipeline_mode<synchronous>, transform_indices = @transform_1, window_bounds = array<i64: 16, 128>}, {pipeline_mode = #tpu.pipeline_mode<synchronous>, transform_indices = @transform_2, window_bounds = array<i64: 1, 128>}, {pipeline_mode = #tpu.pipeline_mode<synchronous>, transform_indices = @transform_3, window_bounds = array<i64: 128, 128>}, {pipeline_mode = #tpu.pipeline_mode<synchronous>, transform_indices = @transform_4, window_bounds = array<i64: 1, 128>}, {transform_indices = @transform_5, window_bounds = array<i64: 8, 128>}]} {
    %c0 = arith.constant 0 : index
    %c0_0 = arith.constant 0 : index
    %0 = vector.load %arg1[%c0, %c0_0] : memref<8x16xf32, #tpu.memory_space<vmem>>, vector<8x16xf32>
    %c0_1 = arith.constant 0 : index
    %c0_2 = arith.constant 0 : index
    %1 = vector.load %arg2[%c0_1, %c0_2] : memref<16x128xf32, #tpu.memory_space<vmem>>, vector<16x128xf32>
    %cst = arith.constant dense<0.000000e+00> : vector<8x128xf32>
    %2 = tpu.matmul %0, %1, %cst {dimension_numbers = #tpu.dot_dimension_numbers<[1], [0], [0], [1], [0, 0, 1, 1], [], []>} : vector<8x16xf32>, vector<16x128xf32>, vector<8x128xf32> -> vector<8x128xf32>
    %c0_3 = arith.constant 0 : index
    %c0_4 = arith.constant 0 : index
    %3 = vector.load %arg3[%c0_3, %c0_4] : memref<1x128xf32, #tpu.memory_space<vmem>>, vector<1x128xf32>
    %4 = vector.broadcast %3 : vector<1x128xf32> to vector<8x128xf32>
    %5 = arith.addf %2, %4 : vector<8x128xf32>
    %cst_5 = arith.constant 0.000000e+00 : f32
    %6 = vector.broadcast %cst_5 : f32 to vector<8x128xf32>
    %7 = arith.maximumf %5, %6 : vector<8x128xf32>
    %c0_6 = arith.constant 0 : index
    %c0_7 = arith.constant 0 : index
    %8 = vector.load %arg4[%c0_6, %c0_7] : memref<128x128xf32, #tpu.memory_space<vmem>>, vector<128x128xf32>
    %cst_8 = arith.constant dense<0.000000e+00> : vector<8x128xf32>
    %9 = tpu.matmul %7, %8, %cst_8 {dimension_numbers = #tpu.dot_dimension_numbers<[1], [0], [0], [1], [0, 0, 1, 1], [], []>} : vector<8x128xf32>, vector<128x128xf32>, vector<8x128xf32> -> vector<8x128xf32>
    %c0_9 = arith.constant 0 : index
    %c0_10 = arith.constant 0 : index
    %10 = vector.load %arg5[%c0_9, %c0_10] : memref<1x128xf32, #tpu.memory_space<vmem>>, vector<1x128xf32>
    %11 = vector.broadcast %10 : vector<1x128xf32> to vector<8x128xf32>
    %12 = arith.addf %9, %11 : vector<8x128xf32>
    %c0_11 = arith.constant 0 : index
    %c0_12 = arith.constant 0 : index
    %13 = vector.load %arg6[%c0_11, %c0_12] : memref<8x128xf32, #tpu.memory_space<vmem>>, vector<8x128xf32>
    tpu.vector_store %arg6[%c0_11, %c0_12], %12 {strides = array<i32>} : memref<8x128xf32, #tpu.memory_space<vmem>>, vector<8x128xf32>,
    return
  }
  func.func @transform_0(%arg0: i32) -> (i32, i32) {
    %c0_i32 = arith.constant 0 : i32
    %c0_i32_0 = arith.constant 0 : i32
    return %arg0, %c0_i32 : i32, i32
  }
  func.func @transform_1(%arg0: i32) -> (i32, i32) {
    %c0_i32 = arith.constant 0 : i32
    %c0_i32_0 = arith.constant 0 : i32
    %c0_i32_1 = arith.constant 0 : i32
    return %c0_i32, %c0_i32_0 : i32, i32
  }
  func.func @transform_2(%arg0: i32) -> (i32, i32) {
    %c0_i32 = arith.constant 0 : i32
    %c0_i32_0 = arith.constant 0 : i32
    %c0_i32_1 = arith.constant 0 : i32
    return %c0_i32, %c0_i32_0 : i32, i32
  }
  func.func @transform_3(%arg0: i32) -> (i32, i32) {
    %c0_i32 = arith.constant 0 : i32
    %c0_i32_0 = arith.constant 0 : i32
    %c0_i32_1 = arith.constant 0 : i32
    return %c0_i32, %c0_i32_0 : i32, i32
  }
  func.func @transform_4(%arg0: i32) -> (i32, i32) {
    %c0_i32 = arith.constant 0 : i32
    %c0_i32_0 = arith.constant 0 : i32
    %c0_i32_1 = arith.constant 0 : i32
    return %c0_i32, %c0_i32_0 : i32, i32
  }
  func.func @transform_5(%arg0: i32) -> (i32, i32) {
    %c0_i32 = arith.constant 0 : i32
    %c0_i32_0 = arith.constant 0 : i32
    return %arg0, %c0_i32 : i32, i32
  }
}

</mosaic_0001>

<llo_original>
// kernel: forward.1
$region0: #{forward.1}
  #allocation0 [shape = 'u32[]', space=smem, size = 0x4, offset = 0x4, fixed_abs, tag = 'smem constant byte address 0x4 - core index']
  #allocation1 [shape = 'u32[144,128]{1,0:T(1,128)}', space=vmem, size = 0x12000, scoped, tag = 'internal scratch']
  %s0 = inlined_call_operand.hbm [shape: f32[8,16], index: 0, kind: input, shape index: {}]
  %s1 = inlined_call_operand.hbm [shape: f32[16,128], index: 1, kind: input, shape index: {}]
  %s2 = inlined_call_operand.vmem [shape: f32[1,128], index: 2, kind: input, shape index: {}]
  %s3 = inlined_call_operand.hbm [shape: f32[128,128], index: 3, kind: input, shape index: {}]
  %s4 = inlined_call_operand.vmem [shape: f32[1,128], index: 4, kind: input, shape index: {}]
  %s5 = inlined_call_operand.hbm [shape: f32[8,128], index: 5, kind: output, shape index: {}]
  %s6 = sld [smem:[#allocation0]]
  $region42: #{forward.1} parent=0
    _
  %s8 = ssub.s32 1, %s6
  %s9 = scalar_select 0, %s8, %s6
  $region1: #{forward.1} parent=0
    #allocation2 [shape = 'u8[4096]{0}', space=vmem, size = 0x1000, scoped, tag = 'input window, operand 0, single buffered']
    #allocation3 [shape = 's32[1]{0}', space=sflag, size = 0x4, scoped, tag = 'scoped memory for forward.1']
    #allocation4 [shape = 's32[1]{0}', space=sflag, size = 0x4, scoped, tag = 'scoped memory for forward.1']
    #allocation5 [shape = 'u8[8192]{0}', space=vmem, size = 0x2000, scoped, tag = 'input window, operand 1, single buffered']
    #allocation6 [shape = 's32[1]{0}', space=sflag, size = 0x4, scoped, tag = 'scoped memory for forward.1']
    #allocation7 [shape = 'u8[65536]{0}', space=vmem, size = 0x10000, scoped, tag = 'input window, operand 3, single buffered']
    #allocation8 [shape = 'u8[4096]{0}', space=vmem, size = 0x1000, scoped, tag = 'output window, operand 0, single buffered']
    %10 = vsyncpa [#allocation3], 0
    %11 = vsyncpa [#allocation6], 0
    %12 = vsyncpa [#allocation4], 0
    // Predicated region
    $region2: #{forward.1} parent=1 // pred_check
      _
    $region3: #{forward.1} parent=1 // pred_check_branch
      %14 = sbr.rel (0) target = $region5
    $region4: #{forward.1} parent=1 // pred_region
      %s16 = ssub.s32 128, 128
      %17 = vsyncadd [#allocation3], %s16
      %s19 = sshll.u32 [#allocation2], 4
      %s20 = int_to_ptr.vmem [resolvable:$true] %s19
      %22 = dma.hbm_to_vmem [thread:$0]  %s0, 128, %s20, [#allocation3]
    $region5: #{forward.1} parent=1 // pred_fallthru
      _
    // Predicated region
    $region6: #{forward.1} parent=1 // pred_check
      _
    $region7: #{forward.1} parent=1 // pred_check_branch
      %24 = sbr.rel (0) target = $region9
    $region8: #{forward.1} parent=1 // pred_region
      %s26 = ssub.s32 256, 256
      %27 = vsyncadd [#allocation6], %s26
      %s28 = sshll.u32 [#allocation5], 4
      %s29 = int_to_ptr.vmem [resolvable:$true] %s28
      %34 = dma.hbm_to_vmem [thread:$0]  %s1, 256, %s29, [#allocation6], 128, 128, 8
    $region9: #{forward.1} parent=1 // pred_fallthru
      _
    // Predicated region
    $region10: #{forward.1} parent=1 // pred_check
      _
    $region11: #{forward.1} parent=1 // pred_check_branch
      %36 = sbr.rel (0) target = $region13
    $region12: #{forward.1} parent=1 // pred_region
      _
    $region13: #{forward.1} parent=1 // pred_fallthru
      _
    // Predicated region
    $region14: #{forward.1} parent=1 // pred_check
      _
    $region15: #{forward.1} parent=1 // pred_check_branch
      %38 = sbr.rel (0) target = $region17
    $region16: #{forward.1} parent=1 // pred_region
      %s40 = ssub.s32 2048, 2048
      %41 = vsyncadd [#allocation6], %s40
      %s42 = sshll.u32 [#allocation7], 4
      %s43 = int_to_ptr.vmem [resolvable:$true] %s42
      %48 = dma.hbm_to_vmem [thread:$0]  %s3, 2048, %s43, [#allocation6], 128, 128, 8
    $region17: #{forward.1} parent=1 // pred_fallthru
      _
    // Predicated region
    $region18: #{forward.1} parent=1 // pred_check
      _
    $region19: #{forward.1} parent=1 // pred_check_branch
      %50 = sbr.rel (0) target = $region21
    $region20: #{forward.1} parent=1 // pred_region
      _
    $region21: #{forward.1} parent=1 // pred_fallthru
      _
    // Predicated region
    $region22: #{forward.1} parent=1 // pred_check
      _
    $region23: #{forward.1} parent=1 // pred_check_branch
      %52 = sbr.rel (0) target = $region25
    $region24: #{forward.1} parent=1 // pred_region
      %53 = dma.done [#allocation3], 128
    $region25: #{forward.1} parent=1 // pred_fallthru
      _
    // Predicated region
    $region26: #{forward.1} parent=1 // pred_check
      _
    $region27: #{forward.1} parent=1 // pred_check_branch
      %55 = sbr.rel (0) target = $region29
    $region28: #{forward.1} parent=1 // pred_region
      %56 = dma.done [#allocation6], 256
    $region29: #{forward.1} parent=1 // pred_fallthru
      _
    // Predicated region
    $region30: #{forward.1} parent=1 // pred_check
      _
    $region31: #{forward.1} parent=1 // pred_check_branch
      %58 = sbr.rel (0) target = $region33
    $region32: #{forward.1} parent=1 // pred_region
      %59 = dma.done [#allocation6], 2048
    $region33: #{forward.1} parent=1 // pred_fallthru
      _
    %v60 = vld [vmem:[#allocation2] sm:$0xff]
    %v61 = vld [vmem:[#allocation5] sm:$0xff]
    %v62 = vld [vmem:[#allocation5 + $0x8] sm:$0xff]
    %v63 = vld [vmem:[%s2] sm:$0x1]
    %v65 = vlaneseq
    %v66 = vshrl.u32 %v65, 7
    %v67 = vsub.s32 0, %v66
    %v68 = vrot.slane %v63, %v67
    %vm70 = vcmask 130048
    %v72 = vsel %vm70, %v60, 0
    %74 = vmatprep.subr.mxu0 0.0
    %75 = vmatpush1.msra.mxu0 0.0
    %76 = vmatprep.subr.mxu0 0.0
    %77 = vmatpush1.msra.mxu0 0.0
    %78 = vmatprep.subr.mxu0 0.0
    %79 = vmatpush1.msra.mxu0 0.0
    %80 = vmatprep.subr.mxu0 0.0
    %81 = vmatpush1.msra.mxu0 0.0
    %82 = vmatprep.subr.mxu0 0.0
    %83 = vmatpush1.msra.mxu0 0.0
    %84 = vmatprep.subr.mxu0 0.0
    %85 = vmatpush1.msra.mxu0 0.0
    %86 = vmatprep.subr.mxu0 0.0
    %87 = vmatpush1.msra.mxu0 0.0
    %88 = vmatprep.subr.mxu0 0.0
    %89 = vmatpush1.msra.mxu0 0.0
    %90 = vmatprep.subr.mxu0 0.0
    %91 = vmatpush1.msra.mxu0 0.0
    %92 = vmatprep.subr.mxu0 0.0
    %93 = vmatpush1.msra.mxu0 0.0
    %94 = vmatprep.subr.mxu0 0.0
    %95 = vmatpush1.msra.mxu0 0.0
    %96 = vmatprep.subr.mxu0 0.0
    %97 = vmatpush1.msra.mxu0 0.0
    %98 = vmatprep.subr.mxu0 0.0
    %99 = vmatpush1.msra.mxu0 0.0
    %100 = vmatprep.subr.mxu0 0.0
    %101 = vmatpush1.msra.mxu0 0.0
    %102 = vmatprep.subr.mxu0 0.0
    %103 = vmatpush1.msra.mxu0 %v62
    %104 = vmatprep.subr.mxu0 0.0
    %105 = vmatpush1.msra.mxu0 %v61
    %106 = vmatprep.subr.mxu0 0.0
    %107 = vmatpush2.msra.mxu0 0.0
    %108 = vmatprep.subr.mxu0 0.0
    %109 = vmatpush2.msra.mxu0 0.0
    %110 = vmatprep.subr.mxu0 0.0
    %111 = vmatpush2.msra.mxu0 0.0
    %112 = vmatprep.subr.mxu0 0.0
    %113 = vmatpush2.msra.mxu0 0.0
    %114 = vmatprep.subr.mxu0 0.0
    %115 = vmatpush2.msra.mxu0 0.0
    %116 = vmatprep.subr.mxu0 0.0
    %117 = vmatpush2.msra.mxu0 0.0
    %118 = vmatprep.subr.mxu0 0.0
    %119 = vmatpush2.msra.mxu0 0.0
    %120 = vmatprep.subr.mxu0 0.0
    %121 = vmatpush2.msra.mxu0 0.0
    %122 = vmatprep.subr.mxu0 0.0
    %123 = vmatpush2.msra.mxu0 0.0
    %124 = vmatprep.subr.mxu0 0.0
    %125 = vmatpush2.msra.mxu0 0.0
    %126 = vmatprep.subr.mxu0 0.0
    %127 = vmatpush2.msra.mxu0 0.0
    %128 = vmatprep.subr.mxu0 0.0
    %129 = vmatpush2.msra.mxu0 0.0
    %130 = vmatprep.subr.mxu0 0.0
    %131 = vmatpush2.msra.mxu0 0.0
    %132 = vmatprep.subr.mxu0 0.0
    %133 = vmatpush2.msra.mxu0 0.0
    %134 = vmatprep.subr.mxu0 0.0
    %135 = vmatpush2.msra.mxu0 0.0
    %136 = vmatprep.subr.mxu0 0.0
    %137 = vmatpush2.msra.mxu0 0.0
    %138 = vmatprep.mubr.f32.mxu0 0.0
    %139 = vmatmul.mubr.f32.gmra.mxu0 %v72
    %v140 = vpop.f32.mrf.mxu0
    %v141 = vadd.f32 %v68, %v140
    %v142 = vpop.f32.mrf.mxu0
    %143 = vdwg.mxu0
    %v144 = vmax.f32 %v141, 0.0
    %v145 = vld [vmem:[#allocation7] sm:$0xff]
    %v146 = vld [vmem:[#allocation7 + $0x8] sm:$0xff]
    %v147 = vld [vmem:[#allocation7 + $0x10] sm:$0xff]
    %v148 = vld [vmem:[#allocation7 + $0x18] sm:$0xff]
    %v149 = vld [vmem:[#allocation7 + $0x20] sm:$0xff]
    %v150 = vld [vmem:[#allocation7 + $0x28] sm:$0xff]
    %v151 = vld [vmem:[#allocation7 + $0x30] sm:$0xff]
    %v152 = vld [vmem:[#allocation7 + $0x38] sm:$0xff]
    %v153 = vld [vmem:[#allocation7 + $0x40] sm:$0xff]
    %v154 = vld [vmem:[#allocation7 + $0x48] sm:$0xff]
    %v155 = vld [vmem:[#allocation7 + $0x50] sm:$0xff]
    %v156 = vld [vmem:[#allocation7 + $0x58] sm:$0xff]
    %v157 = vld [vmem:[#allocation7 + $0x60] sm:$0xff]
    %v158 = vld [vmem:[#allocation7 + $0x68] sm:$0xff]
    %v159 = vld [vmem:[#allocation7 + $0x70] sm:$0xff]
    %v160 = vld [vmem:[#allocation7 + $0x78] sm:$0xff]
    %v161 = vld [vmem:[%s4] sm:$0x1]
    %v163 = vlaneseq
    %v164 = vshrl.u32 %v163, 7
    %v165 = vsub.s32 0, %v164
    %v166 = vrot.slane %v161, %v165
    %168 = vmatprep.subr.mxu0 0.0
    %169 = vmatpush1.msra.mxu0 %v160
    %170 = vmatprep.subr.mxu0 0.0
    %171 = vmatpush1.msra.mxu0 %v159
    %172 = vmatprep.subr.mxu0 0.0
    %173 = vmatpush1.msra.mxu0 %v158
    %174 = vmatprep.subr.mxu0 0.0
    %175 = vmatpush1.msra.mxu0 %v157
    %176 = vmatprep.subr.mxu0 0.0
    %177 = vmatpush1.msra.mxu0 %v156
    %178 = vmatprep.subr.mxu0 0.0
    %179 = vmatpush1.msra.mxu0 %v155
    %180 = vmatprep.subr.mxu0 0.0
    %181 = vmatpush1.msra.mxu0 %v154
    %182 = vmatprep.subr.mxu0 0.0
    %183 = vmatpush1.msra.mxu0 %v153
    %184 = vmatprep.subr.mxu0 0.0
    %185 = vmatpush1.msra.mxu0 %v152
    %186 = vmatprep.subr.mxu0 0.0
    %187 = vmatpush1.msra.mxu0 %v151
    %188 = vmatprep.subr.mxu0 0.0
    %189 = vmatpush1.msra.mxu0 %v150
    %190 = vmatprep.subr.mxu0 0.0
    %191 = vmatpush1.msra.mxu0 %v149
    %192 = vmatprep.subr.mxu0 0.0
    %193 = vmatpush1.msra.mxu0 %v148
    %194 = vmatprep.subr.mxu0 0.0
    %195 = vmatpush1.msra.mxu0 %v147
    %196 = vmatprep.subr.mxu0 0.0
    %197 = vmatpush1.msra.mxu0 %v146
    %198 = vmatprep.subr.mxu0 0.0
    %199 = vmatpush1.msra.mxu0 %v145
    %200 = vmatprep.subr.mxu0 0.0
    %201 = vmatpush2.msra.mxu0 0.0
    %202 = vmatprep.subr.mxu0 0.0
    %203 = vmatpush2.msra.mxu0 0.0
    %204 = vmatprep.subr.mxu0 0.0
    %205 = vmatpush2.msra.mxu0 0.0
    %206 = vmatprep.subr.mxu0 0.0
    %207 = vmatpush2.msra.mxu0 0.0
    %208 = vmatprep.subr.mxu0 0.0
    %209 = vmatpush2.msra.mxu0 0.0
    %210 = vmatprep.subr.mxu0 0.0
    %211 = vmatpush2.msra.mxu0 0.0
    %212 = vmatprep.subr.mxu0 0.0
    %213 = vmatpush2.msra.mxu0 0.0
    %214 = vmatprep.subr.mxu0 0.0
    %215 = vmatpush2.msra.mxu0 0.0
    %216 = vmatprep.subr.mxu0 0.0
    %217 = vmatpush2.msra.mxu0 0.0
    %218 = vmatprep.subr.mxu0 0.0
    %219 = vmatpush2.msra.mxu0 0.0
    %220 = vmatprep.subr.mxu0 0.0
    %221 = vmatpush2.msra.mxu0 0.0
    %222 = vmatprep.subr.mxu0 0.0
    %223 = vmatpush2.msra.mxu0 0.0
    %224 = vmatprep.subr.mxu0 0.0
    %225 = vmatpush2.msra.mxu0 0.0
    %226 = vmatprep.subr.mxu0 0.0
    %227 = vmatpush2.msra.mxu0 0.0
    %228 = vmatprep.subr.mxu0 0.0
    %229 = vmatpush2.msra.mxu0 0.0
    %230 = vmatprep.subr.mxu0 0.0
    %231 = vmatpush2.msra.mxu0 0.0
    %232 = vmatprep.mubr.f32.mxu0 0.0
    %233 = vmatmul.mubr.f32.gmra.mxu0 %v144
    %v234 = vpop.f32.mrf.mxu0
    %v235 = vadd.f32 %v166, %v234
    %v236 = vpop.f32.mrf.mxu0
    %237 = vdwg.mxu0
    %238 = vst [vmem:[#allocation8] sm:$0xff] %v235
    // Predicated region
    $region34: #{forward.1} parent=1 // pred_check
      _
    $region35: #{forward.1} parent=1 // pred_check_branch
      %240 = sbr.rel (0) target = $region37
    $region36: #{forward.1} parent=1 // pred_region
      %s242 = ssub.s32 128, 128
      %243 = vsyncadd [#allocation4], %s242
      %s245 = sshll.u32 [#allocation8], 4
      %s246 = int_to_ptr.vmem [resolvable:$true] %s245
      %248 = dma.vmem_to_hbm [thread:$0]  %s246, 128, %s5, [#allocation4]
    $region37: #{forward.1} parent=1 // pred_fallthru
      _
    // Predicated region
    $region38: #{forward.1} parent=1 // pred_check
      _
    $region39: #{forward.1} parent=1 // pred_check_branch
      %250 = sbr.rel (0) target = $region41
    $region40: #{forward.1} parent=1 // pred_region
      %251 = dma.done [#allocation4], 128
    $region41: #{forward.1} parent=1 // pred_fallthru
      _
    %252 = vsyncpa [#allocation3], 1
    %253 = vsyncpa [#allocation6], 1
    %254 = vsyncpa [#allocation4], 1

</llo_original>
